<compile_context>
chip_gen: v6e
topology: v6e:2x2x1
jax: 0.10.0
libtpu: 0.0.40
codegen_flags: <defaults>
</compile_context>

<pallas_src>
import math
import functools

import jax
import jax.numpy as jnp
from jax import lax
from jax.experimental import pallas as pl
from jax.experimental.pallas import tpu as pltpu


_NEG_INF = -1e30
_VMEM_LIMIT = 48 * 1024 * 1024  # headroom even on v7x's 64 MiB per-TC VMEM


def _pick_tile(n, target):
    """Largest tile <= target that evenly divides n and keeps 8-row alignment."""
    if n <= target:
        return n
    t = (target // 8) * 8
    while t >= 8:
        if n % t == 0:
            return t
        t -= 8
    return n  # fallback: full extent (always a legal block)


# ----------------------------------------------------------------------------
# Linear (dense) projection kernel: y = x @ W + b
# ----------------------------------------------------------------------------
def _linear_kernel(x_ref, w_ref, b_ref, o_ref):
    # x_ref: (1, tm, C); w_ref: (C, N); b_ref: (1, N); o_ref: (1, tm, N)
    y = jnp.dot(x_ref[0], w_ref[...], preferred_element_type=jnp.float32)
    y = y + b_ref[...].astype(jnp.float32)
    o_ref[0] = y.astype(o_ref.dtype)


def _linear(x, w, b, *, tile_m=256):
    B, T, C = x.shape
    N = w.shape[1]
    tm = _pick_tile(T, tile_m)
    grid = (B, T // tm)

    isz = x.dtype.itemsize
    flops = 2 * B * T * C * N
    bytes_accessed = (x.size + w.size + b.size + B * T * N) * isz

    return pl.pallas_call(
        _linear_kernel,
        out_shape=jax.ShapeDtypeStruct((B, T, N), x.dtype),
        grid_spec=pltpu.PrefetchScalarGridSpec(
            num_scalar_prefetch=0,
            grid=grid,
            in_specs=[
                pl.BlockSpec((1, tm, C), lambda b, i: (b, i, 0)),   # x tile
                pl.BlockSpec((C, N), lambda b, i: (0, 0)),          # weight (resident)
                pl.BlockSpec((1, N), lambda b, i: (0, 0)),          # bias
            ],
            out_specs=pl.BlockSpec((1, tm, N), lambda b, i: (b, i, 0)),
        ),
        compiler_params=pltpu.CompilerParams(
            dimension_semantics=("parallel", "parallel"),
            vmem_limit_bytes=_VMEM_LIMIT),
        cost_estimate=pl.CostEstimate(flops=flops, transcendentals=0,
                                      bytes_accessed=bytes_accessed),
    )(x, w, b.reshape(1, N))


# ----------------------------------------------------------------------------
# Flash-style causal attention kernel (online softmax over KV tiles)
# ----------------------------------------------------------------------------
def _flash_attn_kernel(q_ref, k_ref, v_ref, o_ref, m_ref, l_ref, acc_ref,
                       *, scale, tq, tk):
    qi = pl.program_id(2)
    ki = pl.program_id(3)
    nk = pl.num_programs(3)

    @pl.when(ki == 0)
    def _init():
        m_ref[...] = jnp.full_like(m_ref, _NEG_INF)
        l_ref[...] = jnp.zeros_like(l_ref)
        acc_ref[...] = jnp.zeros_like(acc_ref)

    # Causal tile-skip: a KV tile contributes only if its first column index
    # is <= the last row index of the Q tile.
    @pl.when(ki * tk <= qi * tq + (tq - 1))
    def _compute():
        q = q_ref[0, 0]                                   # (tq, D)
        k = k_ref[0, 0]                                   # (tk, D)
        v = v_ref[0, 0]                                   # (tk, D)

        # scores with f32 accumulation; softmax statistics stay f32
        s = lax.dot_general(q, k, (((1,), (1,)), ((), ())),
                            preferred_element_type=jnp.float32) * scale  # (tq, tk)

        row = qi * tq + lax.broadcasted_iota(jnp.int32, (tq, tk), 0)
        col = ki * tk + lax.broadcasted_iota(jnp.int32, (tq, tk), 1)
        s = jnp.where(col <= row, s, _NEG_INF)

        m_prev = m_ref[...]                                            # (tq, 1)
        m_new = jnp.maximum(m_prev, jnp.max(s, axis=-1, keepdims=True))
        alpha = jnp.exp(m_prev - m_new)                                # (tq, 1)
        p = jnp.exp(s - m_new)                                         # (tq, tk)

        l_ref[...] = alpha * l_ref[...] + jnp.sum(p, axis=-1, keepdims=True)
        acc_ref[...] = alpha * acc_ref[...] + jnp.dot(
            p.astype(v.dtype), v, preferred_element_type=jnp.float32)
        m_ref[...] = m_new

    @pl.when(ki == nk - 1)
    def _finalize():
        # Deferred softmax normalization: single multiply by 1/l (EUP reciprocal).
        inv_l = pl.reciprocal(l_ref[...], approx=True)
        o_ref[0, 0] = (acc_ref[...] * inv_l).astype(o_ref.dtype)


def _flash_attention(q, k, v, *, scale, tile_q=256, tile_k=256):
    B, H, T, D = q.shape
    tq = _pick_tile(T, tile_q)
    tk = _pick_tile(T, tile_k)
    grid = (B, H, T // tq, T // tk)

    kernel = functools.partial(_flash_attn_kernel, scale=scale, tq=tq, tk=tk)

    isz = q.dtype.itemsize
    flops = 2 * B * H * T * T * D            # QK^T + PV, ~halved by causal skip
    transcendentals = B * H * T * T // 2
    bytes_accessed = 4 * B * H * T * D * isz

    return pl.pallas_call(
        kernel,
        out_shape=jax.ShapeDtypeStruct((B, H, T, D), q.dtype),
        grid_spec=pltpu.PrefetchScalarGridSpec(
            num_scalar_prefetch=0,
            grid=grid,
            in_specs=[
                pl.BlockSpec((1, 1, tq, D), lambda b, h, i, j: (b, h, i, 0)),  # Q
                pl.BlockSpec((1, 1, tk, D), lambda b, h, i, j: (b, h, j, 0)),  # K
                pl.BlockSpec((1, 1, tk, D), lambda b, h, i, j: (b, h, j, 0)),  # V
            ],
            out_specs=pl.BlockSpec((1, 1, tq, D), lambda b, h, i, j: (b, h, i, 0)),
            scratch_shapes=[
                pltpu.VMEM((tq, 1), jnp.float32),   # running max
                pltpu.VMEM((tq, 1), jnp.float32),   # running denominator
                pltpu.VMEM((tq, D), jnp.float32),   # running (unnormalized) output
            ],
        ),
        compiler_params=pltpu.CompilerParams(
            dimension_semantics=("parallel", "parallel", "parallel", "arbitrary"),
            vmem_limit_bytes=_VMEM_LIMIT),
        cost_estimate=pl.CostEstimate(flops=flops,
                                      transcendentals=transcendentals,
                                      bytes_accessed=bytes_accessed),
    )(q, k, v)


# ----------------------------------------------------------------------------
# Full module forward
# ----------------------------------------------------------------------------
def causal_mha(x, w_qkv, b_qkv, w_out, b_out, *, n_heads):
    """x: (B, T, C); w_qkv: (C, 3C); b_qkv: (3C,); w_out: (C, C); b_out: (C,)."""
    B, T, C = x.shape
    assert C % n_heads == 0
    D = C // n_heads

    # QKV projection: one lane-dense matmul per (batch, row-tile).
    qkv = _linear(x, w_qkv, b_qkv)                         # (B, T, 3C)

    # Wrapper-side relayout to (B, H, T, D): keeps sub-128-lane head slicing /
    # concatenation out of the kernels entirely.
    qkv = qkv.reshape(B, T, 3, n_heads, D)
    qkv = jnp.transpose(qkv, (2, 0, 3, 1, 4))              # (3, B, H, T, D)
    q, k, v = qkv[0], qkv[1], qkv[2]

    # Flash-style causal attention with online softmax.
    o = _flash_attention(q, k, v, scale=1.0 / math.sqrt(D))  # (B, H, T, D)

    # (B, H, T, D) -> (B, T, C)
    attn = jnp.transpose(o, (0, 2, 1, 3)).reshape(B, T, C)

    # Output projection.
    # TODO(synk): training-mode attention/residual dropout not implemented
    # (matches eval mode of the PyTorch module).
    return _linear(attn, w_out, b_out)


# ----------------------------------------------------------------------------
# Pure-JAX reference
# ----------------------------------------------------------------------------
def _reference(x, w_qkv, b_qkv, w_out, b_out, n_heads):
    B, T, C = x.shape
    D = C // n_heads
    qkv = x @ w_qkv + b_qkv
    q, k, v = jnp.split(qkv, 3, axis=-1)
    q = q.reshape(B, T, n_heads, D).transpose(0, 2, 1, 3)
    k = k.reshape(B, T, n_heads, D).transpose(0, 2, 1, 3)
    v = v.reshape(B, T, n_heads, D).transpose(0, 2, 1, 3)
    s = jnp.einsum('bhqd,bhkd->bhqk', q, k) / math.sqrt(D)
    mask = jnp.tril(jnp.ones((T, T), dtype=bool))
    s = jnp.where(mask, s, -jnp.inf)
    p = jax.nn.softmax(s, axis=-1)
    o = jnp.einsum('bhqk,bhkd->bhqd', p, v)
    o = o.transpose(0, 2, 1, 3).reshape(B, T, C)
    return o @ w_out + b_out


if __name__ == "__main__":
    # GPT2Config-like toy: n_heads=4, emb_dim=32; batch=2, seq=8
    B, T, C, H = 2, 8, 32, 4

    key = jax.random.PRNGKey(0)
    k1, k2, k3, k4, k5 = jax.random.split(key, 5)

    x = jax.random.normal(k1, (B, T, C), dtype=jnp.float32)
    bound = 1.0 / math.sqrt(C)
    w_qkv = jax.random.uniform(k2, (C, 3 * C), jnp.float32, -bound, bound)
    b_qkv = jax.random.uniform(k3, (3 * C,), jnp.float32, -bound, bound)
    w_out = jax.random.uniform(k4, (C, C), jnp.float32, -bound, bound)
    b_out = jax.random.uniform(k5, (C,), jnp.float32, -bound, bound)

    out = causal_mha(x, w_qkv, b_qkv, w_out, b_out, n_heads=H)
    out = jax.block_until_ready(out)

    ref = _reference(x, w_qkv, b_qkv, w_out, b_out, H)
    assert out.shape == (B, T, C)
    # tolerance accounts for approx (EUP) reciprocal in deferred softmax normalization
    assert jnp.allclose(out, ref, atol=5e-3, rtol=5e-3), "mismatch vs reference"

    print("KERNEL_OK")
</pallas_src>

<mosaic_0001>
module attributes {stable_mosaic.version = 11 : i64} {
  func.func @_linear_kernel(%arg0: i32, %arg1: i32, %arg2: memref<1x8x32xf32, #tpu.memory_space<vmem>>, %arg3: memref<32x96xf32, #tpu.memory_space<vmem>>, %arg4: memref<1x96xf32, #tpu.memory_space<vmem>>, %arg5: memref<1x8x96xf32, #tpu.memory_space<vmem>>) attributes {dimension_semantics = [#tpu.dimension_semantics<parallel>, #tpu.dimension_semantics<parallel>], iteration_bounds = array<i64: 2, 1>, scalar_prefetch = 0 : i64, scratch_operands = 0 : i64, tpu.core_type = #tpu.core_type<tc>, window_params = [{transform_indices = @transform_0, window_bounds = array<i64: 1, 8, 32>}, {pipeline_mode = #tpu.pipeline_mode<synchronous>, transform_indices = @transform_1, window_bounds = array<i64: 32, 96>}, {pipeline_mode = #tpu.pipeline_mode<synchronous>, transform_indices = @transform_2, window_bounds = array<i64: 1, 96>}, {transform_indices = @transform_3, window_bounds = array<i64: 1, 8, 96>}]} {
    %c0 = arith.constant 0 : index
    %c0_0 = arith.constant 0 : index
    %c0_1 = arith.constant 0 : index
    %0 = vector.load %arg2[%c0, %c0_0, %c0_1] : memref<1x8x32xf32, #tpu.memory_space<vmem>>, vector<1x8x32xf32>
    %1 = vector.shape_cast %0 : vector<1x8x32xf32> to vector<8x32xf32>
    %c0_2 = arith.constant 0 : index
    %c0_3 = arith.constant 0 : index
    %2 = vector.load %arg3[%c0_2, %c0_3] : memref<32x96xf32, #tpu.memory_space<vmem>>, vector<32x96xf32>
    %cst = arith.constant dense<0.000000e+00> : vector<8x96xf32>
    %3 = tpu.matmul %1, %2, %cst {dimension_numbers = #tpu.dot_dimension_numbers<[1], [0], [0], [1], [0, 0, 1, 1], [], []>} : vector<8x32xf32>, vector<32x96xf32>, vector<8x96xf32> -> vector<8x96xf32>
    %c0_4 = arith.constant 0 : index
    %c0_5 = arith.constant 0 : index
    %4 = vector.load %arg4[%c0_4, %c0_5] : memref<1x96xf32, #tpu.memory_space<vmem>>, vector<1x96xf32>
    %5 = vector.broadcast %4 : vector<1x96xf32> to vector<8x96xf32>
    %6 = arith.addf %3, %5 : vector<8x96xf32>
    %c0_6 = arith.constant 0 : index
    %c0_7 = arith.constant 0 : index
    %c0_8 = arith.constant 0 : index
    %7 = vector.load %arg5[%c0_6, %c0_7, %c0_8] : memref<1x8x96xf32, #tpu.memory_space<vmem>>, vector<1x8x96xf32>
    %8 = vector.shape_cast %7 : vector<1x8x96xf32> to vector<8x96xf32>
    %9 = vector.shape_cast %6 : vector<8x96xf32> to vector<1x8x96xf32>
    tpu.vector_store %arg5[%c0_6, %c0_7, %c0_8], %9 {strides = array<i32>} : memref<1x8x96xf32, #tpu.memory_space<vmem>>, vector<1x8x96xf32>,
    return
  }
  func.func @transform_0(%arg0: i32, %arg1: i32) -> (i32, i32, i32) {
    %c0_i32 = arith.constant 0 : i32
    %c0_i32_0 = arith.constant 0 : i32
    return %arg0, %arg1, %c0_i32 : i32, i32, i32
  }
  func.func @transform_1(%arg0: i32, %arg1: i32) -> (i32, i32) {
    %c0_i32 = arith.constant 0 : i32
    %c0_i32_0 = arith.constant 0 : i32
    %c0_i32_1 = arith.constant 0 : i32
    return %c0_i32, %c0_i32_0 : i32, i32
  }
  func.func @transform_2(%arg0: i32, %arg1: i32) -> (i32, i32) {
    %c0_i32 = arith.constant 0 : i32
    %c0_i32_0 = arith.constant 0 : i32
    %c0_i32_1 = arith.constant 0 : i32
    return %c0_i32, %c0_i32_0 : i32, i32
  }
  func.func @transform_3(%arg0: i32, %arg1: i32) -> (i32, i32, i32) {
    %c0_i32 = arith.constant 0 : i32
    %c0_i32_0 = arith.constant 0 : i32
    return %arg0, %arg1, %c0_i32 : i32, i32, i32
  }
}

</mosaic_0001>

<llo_original>
// kernel: tpu_custom_call.1
$region0: #{tpu_custom_call.1}
  #allocation0 [shape = 'u32[]', space=smem, size = 0x4, offset = 0x4, fixed_abs, tag = 'smem constant byte address 0x4 - core index']
  #allocation1 [shape = 'u32[144,128]{1,0:T(1,128)}', space=vmem, size = 0x12000, scoped, tag = 'internal scratch']
  %s0 = inlined_call_operand.hbm [shape: f32[2,8,32], index: 0, kind: input, shape index: {}]
  %s1 = inlined_call_operand.hbm [shape: f32[32,96], index: 1, kind: input, shape index: {}]
  %s2 = inlined_call_operand.vmem [shape: f32[1,96], index: 2, kind: input, shape index: {}]
  %s3 = inlined_call_operand.hbm [shape: f32[2,8,96], index: 3, kind: output, shape index: {}]
  %s4 = sld [smem:[#allocation0]]
  $region53: #{tpu_custom_call.1} parent=0
    _
  %s6 = ssub.s32 1, %s4
  %s7 = scalar_select 0, %s6, %s4
  $region1: #{tpu_custom_call.1} parent=0
    #allocation2 [shape = 'u8[8192]{0}', space=vmem, size = 0x2000, scoped, tag = 'input window, operand 0']
    #allocation3 [shape = 's32[2]{0}', space=sflag, size = 0x8, scoped, tag = 'scoped memory for tpu_custom_call.1']
    #allocation4 [shape = 's32[2]{0}', space=sflag, size = 0x8, scoped, tag = 'scoped memory for tpu_custom_call.1']
    #allocation5 [shape = 'u8[16384]{0}', space=vmem, size = 0x4000, scoped, tag = 'input window, operand 1, single buffered']
    #allocation6 [shape = 's32[1]{0}', space=sflag, size = 0x4, scoped, tag = 'scoped memory for tpu_custom_call.1']
    #allocation7 [shape = 'u8[8192]{0}', space=vmem, size = 0x2000, scoped, tag = 'output window, operand 0']
    %8 = vsyncpa [#allocation3], 0
    %s9 = scalar_lea.sflag [#allocation3], 1
    %10 = vsyncpa %s9, 0
    %11 = vsyncpa [#allocation6], 0
    %12 = vsyncpa [#allocation4], 0
    %s13 = scalar_lea.sflag [#allocation4], 1
    %14 = vsyncpa %s13, 0
    loop: start=0, step=1, limit=4
    $region2: #{tpu_custom_call.1} parent=1 // loop_pre_header
      _
    $region3: #{tpu_custom_call.1} parent=1 // loop_header
      %s16 = sphi 0, %s20
      %p17 = scmp.ge.s32.totalorder %s16, 4
      %s23 = sphi 0, %s35
      %s24 = sphi 0, %s31
      %s25 = sphi 0, %s23
      %s26 = sphi 0, %s24
      %s27 = sphi 0, %s25
      %s28 = sphi 0, %s26
      %s40 = sphi 0, %s42
      %s43 = sphi 0, %s40
      %s44 = sphi 0, %s43
      %s60 = sphi 0, %s44
      %s64 = sphi 0, %s64
      %s66 = sphi 0, %s64
      %s67 = sphi 0, %s66
      %s81 = sphi 0, %s67
      %s85 = sphi 0, %s85
      %s87 = sphi 0, %s85
      %s88 = sphi 0, %s87
      %s102 = sphi 0, %s88
      %s110 = sphi 0, %s112
      %s113 = sphi 0, %s110
      %s114 = sphi 0, %s113
      %s130 = sphi 0, %s114
    $region4: #{tpu_custom_call.1} parent=1 // loop_header_branch
      %19 = sbr.rel (%p17) target = $region8
    $region5: #{tpu_custom_call.1} parent=1 // loop_body
      %s21 = ssub.s32 %s16, 1
      %s22 = ssub.s32 %s16, 2
      %s29 = sadd.s32 1, %s24
      %p30 = scmp.ge.s32.totalorder %s29, 1
      %s31 = scalar_select %p30, 0, %s29
      %s32 = sadd.s32 1, %s23
      %s33 = scalar_select %p30, %s32, %s23
      %p34 = scmp.ge.s32.totalorder %s33, 2
      %s35 = scalar_select %p34, 0, %s33
      %s36 = ssub.s32 %s23, %s35
      %s37 = ssub.s32 %s24, %s31
      %s38 = sor.u32 %s36, %s37
      %p39 = scmp.eq.s32.totalorder %s38, 0
      %s41 = sadd.s32 %s40, 1
      %s42 = scalar_select %p39, %s40, %s41
      %p45 = pneg %p39
      %p46 = scmp.eq.s32.totalorder %s16, 1
      %p47 = por %p45, %p46
      %p48 = scmp.ne.s32.totalorder %s40, %s43
      %p49 = scmp.eq.s32.totalorder %s16, 0
      %p50 = por %p48, %p49
      %p51 = scmp.ne.s32.totalorder %s40, %s43
      %p52 = scmp.eq.s32.totalorder %s21, 1
      %p53 = por %p51, %p52
      %p54 = scmp.ne.s32.totalorder %s43, %s44
      %p55 = scmp.eq.s32.totalorder %s21, 0
      %p56 = por %p54, %p55
      %p57 = scmp.ne.s32.totalorder %s43, %s44
      %p58 = scmp.eq.s32.totalorder %s22, 1
      %p59 = por %p57, %p58
      %p61 = scmp.ne.s32.totalorder %s44, %s60
      %p62 = scmp.eq.s32.totalorder %s22, 0
      %p63 = por %p61, %p62
      %s65 = sadd.s32 %s64, 1
      %p68 = scmp.eq.s32.totalorder %s16, 1
      %p69 = scmp.ne.s32.totalorder %s64, %s66
      %p70 = scmp.eq.s32.totalorder %s16, 0
      %p71 = por %p69, %p70
      %p72 = scmp.ne.s32.totalorder %s64, %s66
      %p73 = scmp.eq.s32.totalorder %s21, 1
      %p74 = por %p72, %p73
      %p75 = scmp.ne.s32.totalorder %s66, %s67
      %p76 = scmp.eq.s32.totalorder %s21, 0
      %p77 = por %p75, %p76
      %p78 = scmp.ne.s32.totalorder %s66, %s67
      %p79 = scmp.eq.s32.totalorder %s22, 1
      %p80 = por %p78, %p79
      %p82 = scmp.ne.s32.totalorder %s67, %s81
      %p83 = scmp.eq.s32.totalorder %s22, 0
      %p84 = por %p82, %p83
      %s86 = sadd.s32 %s85, 1
      %p89 = scmp.eq.s32.totalorder %s16, 1
      %p90 = scmp.ne.s32.totalorder %s85, %s87
      %p91 = scmp.eq.s32.totalorder %s16, 0
      %p92 = por %p90, %p91
      %p93 = scmp.ne.s32.totalorder %s85, %s87
      %p94 = scmp.eq.s32.totalorder %s21, 1
      %p95 = por %p93, %p94
      %p96 = scmp.ne.s32.totalorder %s87, %s88
      %p97 = scmp.eq.s32.totalorder %s21, 0
      %p98 = por %p96, %p97
      %p99 = scmp.ne.s32.totalorder %s87, %s88
      %p100 = scmp.eq.s32.totalorder %s22, 1
      %p101 = por %p99, %p100
      %p103 = scmp.ne.s32.totalorder %s88, %s102
      %p104 = scmp.eq.s32.totalorder %s22, 0
      %p105 = por %p103, %p104
      %s106 = ssub.s32 %s23, %s35
      %s107 = ssub.s32 %s24, %s31
      %s108 = sor.u32 %s106, %s107
      %p109 = scmp.eq.s32.totalorder %s108, 0
      %s111 = sadd.s32 %s110, 1
      %s112 = scalar_select %p109, %s110, %s111
      %p115 = pneg %p109
      %p116 = scmp.eq.s32.totalorder %s16, 1
      %p117 = por %p115, %p116
      %p118 = scmp.ne.s32.totalorder %s110, %s113
      %p119 = scmp.eq.s32.totalorder %s16, 0
      %p120 = por %p118, %p119
      %p121 = scmp.ne.s32.totalorder %s110, %s113
      %p122 = scmp.eq.s32.totalorder %s21, 1
      %p123 = por %p121, %p122
      %p124 = scmp.ne.s32.totalorder %s113, %s114
      %p125 = scmp.eq.s32.totalorder %s21, 0
      %p126 = por %p124, %p125
      %p127 = scmp.ne.s32.totalorder %s113, %s114
      %p128 = scmp.eq.s32.totalorder %s22, 1
      %p129 = por %p127, %p128
      %p131 = scmp.ne.s32.totalorder %s114, %s130
      %p132 = scmp.eq.s32.totalorder %s22, 0
      %p133 = por %p131, %p132
      %p134 = scmp.le.s32.totalorder 1, %s16
      %p135 = scmp.lt.s32.totalorder %s16, 3
      %p136 = pnand %p134, %p135
      %p137 = pneg %p136
      // Predicated region
      $region9: #{tpu_custom_call.1} parent=5 // pred_check
        _
      $region10: #{tpu_custom_call.1} parent=5 // pred_check_branch
        %139 = sbr.rel (%p136) target = $region12
      $region11: #{tpu_custom_call.1} parent=5 // pred_region
        %s140 = ssub.s32 %s16, 1
        // Predicated region
        $region13: #{tpu_custom_call.1} parent=11 // pred_check
          %p141 = pneg %p77
        $region14: #{tpu_custom_call.1} parent=11 // pred_check_branch
          %143 = sbr.rel (%p141) target = $region16
        $region15: #{tpu_custom_call.1} parent=11 // pred_region
          %s145 = ssub.s32 512, 512
          %146 = vsyncadd [#allocation6], %s145
          %s147 = sshll.u32 [#allocation5], 4
          %s148 = int_to_ptr.vmem [resolvable:$true] %s147
          %153 = dma.hbm_to_vmem [thread:$0]  %s1, 512, %s148, [#allocation6], 128, 128, 8
        $region16: #{tpu_custom_call.1} parent=11 // pred_fallthru
          _
        // Predicated region
        $region17: #{tpu_custom_call.1} parent=11 // pred_check
          %p154 = pneg %p98
        $region18: #{tpu_custom_call.1} parent=11 // pred_check_branch
          %156 = sbr.rel (%p154) target = $region20
        $region19: #{tpu_custom_call.1} parent=11 // pred_region
          _
        $region20: #{tpu_custom_call.1} parent=11 // pred_fallthru
          _
      $region12: #{tpu_custom_call.1} parent=5 // pred_fallthru
        _
      %p157 = scmp.lt.s32.totalorder %s16, 2
      // Predicated region
      $region21: #{tpu_custom_call.1} parent=5 // pred_check
        %p158 = pneg %p157
      $region22: #{tpu_custom_call.1} parent=5 // pred_check_branch
        %160 = sbr.rel (%p158) target = $region24
      $region23: #{tpu_custom_call.1} parent=5 // pred_region
        // Predicated region
        $region25: #{tpu_custom_call.1} parent=23 // pred_check
          %p161 = pneg %p50
        $region26: #{tpu_custom_call.1} parent=23 // pred_check_branch
          %163 = sbr.rel (%p161) target = $region28
        $region27: #{tpu_custom_call.1} parent=23 // pred_region
          %s164 = sand.u32 %s40, 1
          %s165 = scalar_lea.sflag [#allocation3], %s164
          %s166 = sand.u32 %s40, 1
          %s167 = smul.addr %s166, 8
          %s168 = scalar_lea.vmem [#allocation2], %s167
          %s170 = ssub.s32 128, 128
          %171 = vsyncadd %s165, %s170
          %s172 = sadd.s32 %s24, %s23
          %s173 = smul.addr %s172, 128
          %s174 = scalar_lea.hbm %s0, %s173
          %s176 = sshll.u32 %s168, 4
          %s177 = int_to_ptr.vmem [resolvable:$true] %s176
          %179 = dma.hbm_to_vmem [thread:$0]  %s174, 128, %s177, %s165
        $region28: #{tpu_custom_call.1} parent=23 // pred_fallthru
          _
      $region24: #{tpu_custom_call.1} parent=5 // pred_fallthru
        _
      %p180 = scmp.le.s32.totalorder 1, %s16
      %p181 = scmp.lt.s32.totalorder %s16, 3
      %p182 = pnand %p180, %p181
      %p183 = pneg %p182
      // Predicated region
      $region29: #{tpu_custom_call.1} parent=5 // pred_check
        _
      $region30: #{tpu_custom_call.1} parent=5 // pred_check_branch
        %185 = sbr.rel (%p182) target = $region32
      $region31: #{tpu_custom_call.1} parent=5 // pred_region
        %s186 = ssub.s32 %s16, 1
        %s187 = sand.u32 %s43, 1
        %s188 = scalar_lea.sflag [#allocation3], %s187
        %s189 = sand.u32 %s43, 1
        %s190 = smul.addr %s189, 8
        %s191 = scalar_lea.vmem [#allocation2], %s190
        // Predicated region
        $region33: #{tpu_custom_call.1} parent=31 // pred_check
          %p192 = pneg %p56
        $region34: #{tpu_custom_call.1} parent=31 // pred_check_branch
          %194 = sbr.rel (%p192) target = $region36
        $region35: #{tpu_custom_call.1} parent=31 // pred_region
          %195 = dma.done %s188, 128
        $region36: #{tpu_custom_call.1} parent=31 // pred_fallthru
          _
        // Predicated region
        $region37: #{tpu_custom_call.1} parent=31 // pred_check
          %p196 = pneg %p77
        $region38: #{tpu_custom_call.1} parent=31 // pred_check_branch
          %198 = sbr.rel (%p196) target = $region40
        $region39: #{tpu_custom_call.1} parent=31 // pred_region
          %199 = dma.done [#allocation6], 512
        $region40: #{tpu_custom_call.1} parent=31 // pred_fallthru
          _
        %s200 = sand.u32 %s43, 1
        %s201 = scalar_lea.sflag [#allocation3], %s200
        %s202 = sand.u32 %s43, 1
        %s203 = smul.addr %s202, 8
        %s204 = scalar_lea.vmem [#allocation2], %s203
        %p205 = pneg %p56
        %p206 = pneg %p53
        %p207 = pneg %p77
        %p208 = pneg %p74
        %p209 = pneg %p98
        %p210 = pneg %p95
        %p211 = pneg %p126
        %p212 = pneg %p123
        %s213 = sand.u32 %s113, 1
        %s214 = scalar_lea.sflag [#allocation4], %s213
        %s215 = sand.u32 %s113, 1
        %s216 = smul.addr %s215, 8
        %s217 = scalar_lea.vmem [#allocation7], %s216
        %v218 = vld [vmem:[%s191] sm:$0xff]
        %v219 = vld [vmem:[#allocation5] sm:$0xff]
        %v220 = vld [vmem:[#allocation5 + $0x8] sm:$0xff]
        %v221 = vld [vmem:[#allocation5 + $0x10] sm:$0xff]
        %v222 = vld [vmem:[#allocation5 + $0x18] sm:$0xff]
        %v223 = vld [vmem:[%s2] sm:$0x1]
        %v225 = vlaneseq
        %v226 = vshrl.u32 %v225, 7
        %v227 = vsub.s32 0, %v226
        %v228 = vrot.slane %v223, %v227
        %vm230 = vcmask 261120
        %v232 = vsel %vm230, %v218, 0
        %234 = vmatprep.subr.mxu0 0.0
        %235 = vmatpush1.msra.mxu0 0.0
        %236 = vmatprep.subr.mxu0 0.0
        %237 = vmatpush1.msra.mxu0 0.0
        %238 = vmatprep.subr.mxu0 0.0
        %239 = vmatpush1.msra.mxu0 0.0
        %240 = vmatprep.subr.mxu0 0.0
        %241 = vmatpush1.msra.mxu0 0.0
        %242 = vmatprep.subr.mxu0 0.0
        %243 = vmatpush1.msra.mxu0 0.0
        %244 = vmatprep.subr.mxu0 0.0
        %245 = vmatpush1.msra.mxu0 0.0
        %246 = vmatprep.subr.mxu0 0.0
        %247 = vmatpush1.msra.mxu0 0.0
        %248 = vmatprep.subr.mxu0 0.0
        %249 = vmatpush1.msra.mxu0 0.0
        %250 = vmatprep.subr.mxu0 0.0
        %251 = vmatpush1.msra.mxu0 0.0
        %252 = vmatprep.subr.mxu0 0.0
        %253 = vmatpush1.msra.mxu0 0.0
        %254 = vmatprep.subr.mxu0 0.0
        %255 = vmatpush1.msra.mxu0 0.0
        %256 = vmatprep.subr.mxu0 0.0
        %257 = vmatpush1.msra.mxu0 0.0
        %258 = vmatprep.subr.mxu0 0.0
        %259 = vmatpush1.msra.mxu0 %v222
        %260 = vmatprep.subr.mxu0 0.0
        %261 = vmatpush1.msra.mxu0 %v221
        %262 = vmatprep.subr.mxu0 0.0
        %263 = vmatpush1.msra.mxu0 %v220
        %264 = vmatprep.subr.mxu0 0.0
        %265 = vmatpush1.msra.mxu0 %v219
        %266 = vmatprep.subr.mxu0 0.0
        %267 = vmatpush2.msra.mxu0 0.0
        %268 = vmatprep.subr.mxu0 0.0
        %269 = vmatpush2.msra.mxu0 0.0
        %270 = vmatprep.subr.mxu0 0.0
        %271 = vmatpush2.msra.mxu0 0.0
        %272 = vmatprep.subr.mxu0 0.0
        %273 = vmatpush2.msra.mxu0 0.0
        %274 = vmatprep.subr.mxu0 0.0
        %275 = vmatpush2.msra.mxu0 0.0
        %276 = vmatprep.subr.mxu0 0.0
        %277 = vmatpush2.msra.mxu0 0.0
        %278 = vmatprep.subr.mxu0 0.0
        %279 = vmatpush2.msra.mxu0 0.0
        %280 = vmatprep.subr.mxu0 0.0
        %281 = vmatpush2.msra.mxu0 0.0
        %282 = vmatprep.subr.mxu0 0.0
        %283 = vmatpush2.msra.mxu0 0.0
        %284 = vmatprep.subr.mxu0 0.0
        %285 = vmatpush2.msra.mxu0 0.0
        %286 = vmatprep.subr.mxu0 0.0
        %287 = vmatpush2.msra.mxu0 0.0
        %288 = vmatprep.subr.mxu0 0.0
        %289 = vmatpush2.msra.mxu0 0.0
        %290 = vmatprep.subr.mxu0 0.0
        %291 = vmatpush2.msra.mxu0 0.0
        %292 = vmatprep.subr.mxu0 0.0
        %293 = vmatpush2.msra.mxu0 0.0
        %294 = vmatprep.subr.mxu0 0.0
        %295 = vmatpush2.msra.mxu0 0.0
        %296 = vmatprep.subr.mxu0 0.0
        %297 = vmatpush2.msra.mxu0 0.0
        %298 = vmatprep.mubr.f32.mxu0 0.0
        %299 = vmatmul.mubr.f32.gmra.mxu0 %v232
        %v300 = vpop.f32.mrf.mxu0
        %v301 = vadd.f32 %v228, %v300
        %v302 = vpop.f32.mrf.mxu0
        %303 = vdwg.mxu0
        %vm304 = vcmask 785408
        %305 = vst.msk [vmem:[%s217] sm:$0xff] %vm304, %v301
        %s306 = sand.u32 %s113, 1
        %s307 = scalar_lea.sflag [#allocation4], %s306
        %s308 = sand.u32 %s113, 1
        %s309 = smul.addr %s308, 8
        %s310 = scalar_lea.vmem [#allocation7], %s309
        // Predicated region
        $region41: #{tpu_custom_call.1} parent=31 // pred_check
          %p311 = pneg %p123
        $region42: #{tpu_custom_call.1} parent=31 // pred_check_branch
          %313 = sbr.rel (%p311) target = $region44
        $region43: #{tpu_custom_call.1} parent=31 // pred_region
          %s315 = ssub.s32 128, 128
          %316 = vsyncadd %s307, %s315
          %s317 = sadd.s32 %s26, %s25
          %s318 = smul.addr %s317, 128
          %s319 = scalar_lea.hbm %s3, %s318
          %s321 = sshll.u32 %s310, 4
          %s322 = int_to_ptr.vmem [resolvable:$true] %s321
          %324 = dma.vmem_to_hbm [thread:$0]  %s322, 128, %s319, %s307
        $region44: #{tpu_custom_call.1} parent=31 // pred_fallthru
          _
      $region32: #{tpu_custom_call.1} parent=5 // pred_fallthru
        _
      %p325 = scmp.le.s32.totalorder 2, %s16
      // Predicated region
      $region45: #{tpu_custom_call.1} parent=5 // pred_check
        %p326 = pneg %p325
      $region46: #{tpu_custom_call.1} parent=5 // pred_check_branch
        %328 = sbr.rel (%p326) target = $region48
      $region47: #{tpu_custom_call.1} parent=5 // pred_region
        %s329 = ssub.s32 %s16, 2
        // Predicated region
        $region49: #{tpu_custom_call.1} parent=47 // pred_check
          %p330 = pneg %p129
        $region50: #{tpu_custom_call.1} parent=47 // pred_check_branch
          %332 = sbr.rel (%p330) target = $region52
        $region51: #{tpu_custom_call.1} parent=47 // pred_region
          %s333 = sand.u32 %s114, 1
          %s334 = scalar_lea.sflag [#allocation4], %s333
          %s335 = sand.u32 %s114, 1
          %s336 = smul.addr %s335, 8
          %s337 = scalar_lea.vmem [#allocation7], %s336
          %338 = dma.done %s334, 128
        $region52: #{tpu_custom_call.1} parent=47 // pred_fallthru
          _
      $region48: #{tpu_custom_call.1} parent=5 // pred_fallthru
        _
    $region6: #{tpu_custom_call.1} parent=1 // loop_footer
      %s20 = sadd.s32 1, %s16
    $region7: #{tpu_custom_call.1} parent=1 // loop_footer_branch
      %15 = sbr.rel target = $region3
    $region8: #{tpu_custom_call.1} parent=1 // loop_exit
      _
    %339 = vsyncpa [#allocation3], 1
    %s340 = scalar_lea.sflag [#allocation3], 1
    %341 = vsyncpa %s340, 1
    %342 = vsyncpa [#allocation6], 1
    %343 = vsyncpa [#allocation4], 1
    %s344 = scalar_lea.sflag [#allocation4], 1
    %345 = vsyncpa %s344, 1

</llo_original>
